<compile_context>
chip_gen: v7x
topology: tpu7x:2x2x1
jax: 0.10.0
libtpu: 0.0.40
codegen_flags: <defaults>
</compile_context>

<pallas_src>
import functools

import jax
import jax.numpy as jnp
from jax.experimental import pallas as pl
from jax.experimental.pallas import tpu as pltpu

LEAKY_SLOPE = 0.01  # torch.nn.functional.leaky_relu default negative_slope

# Logical and padded (lane-dense) layer widths.
H1, H2 = 400, 300
H1_PAD = 512   # 400 -> 512 (multiple of 256: dense MXU passes everywhere)
H2_PAD = 384   # 300 -> 384 (multiple of 128: dense on v5e, ~25% less padding)
OUT_PAD = 128  # lane-dense output store path (no vst.msk)


def _round_up(n, m):
    return ((n + m - 1) // m) * m


def _leaky_relu(x):
    return jnp.where(x >= 0, x, LEAKY_SLOPE * x)


def actor_kernel(x_ref, w1_ref, b1_ref, w2_ref, b2_ref, w3_ref, b3_ref,
                 out_ref, *, max_action):
    # Layer 1: bf16 x bf16 on the MXU, f32 accumulation; f32 bias + leaky_relu.
    h1 = jnp.dot(x_ref[...], w1_ref[...],
                 preferred_element_type=jnp.float32) + b1_ref[...]
    h1 = _leaky_relu(h1)
    # Layer 2.
    h2 = jnp.dot(h1.astype(jnp.bfloat16), w2_ref[...],
                 preferred_element_type=jnp.float32) + b2_ref[...]
    h2 = _leaky_relu(h2)
    # Layer 3 + tanh epilogue scaled by compile-time max_action (VPU/EUP).
    h3 = jnp.dot(h2.astype(jnp.bfloat16), w3_ref[...],
                 preferred_element_type=jnp.float32) + b3_ref[...]
    out_ref[...] = (max_action * jnp.tanh(h3)).astype(out_ref.dtype)


def init_actor_params(key, state_dim, action_dim):
    """nn.Linear-style init U(-1/sqrt(fan_in), 1/sqrt(fan_in)), zero-padded to
    lane-dense shapes. Weights are bf16 (cast once here), biases f32 (1, N).
    The state dim is only padded to a multiple of 16 (bf16 sublane packing),
    not 128. Torch checkpoints must be zero-padded the same way."""
    s_pad = _round_up(max(state_dim, 1), 16)
    a_pad = OUT_PAD

    def linear(key, fan_in, fan_out, fan_in_pad, fan_out_pad):
        kw, kb = jax.random.split(key)
        bound = 1.0 / jnp.sqrt(fan_in)
        w = jax.random.uniform(kw, (fan_in, fan_out), jnp.float32, -bound, bound)
        b = jax.random.uniform(kb, (1, fan_out), jnp.float32, -bound, bound)
        w_p = jnp.zeros((fan_in_pad, fan_out_pad), jnp.float32).at[:fan_in, :fan_out].set(w)
        b_p = jnp.zeros((1, fan_out_pad), jnp.float32).at[:, :fan_out].set(b)
        return w_p.astype(jnp.bfloat16), b_p

    k1, k2, k3 = jax.random.split(key, 3)
    w1, b1 = linear(k1, state_dim, H1, s_pad, H1_PAD)
    w2, b2 = linear(k2, H1, H2, H1_PAD, H2_PAD)
    w3, b3 = linear(k3, H2, action_dim, H2_PAD, a_pad)
    return (w1, b1, w2, b2, w3, b3)


def _choose_tm(batch, tile_m, min_rows_per_core):
    """Pick a balanced batch tile (multiple of 8 sublanes).

    - If one tile would cover the batch but the batch is big enough, split it
      into two balanced tiles so the 'parallel' grid axis can engage both of
      v7x's TensorCores (each half stays >= min_rows_per_core to amortize the
      ~0.35us per-grid-step overhead; neutral-ish on v5e/v6e).
    - If multiple tiles are needed, balance them so the last tile is not
      mostly zero-padding (batch=260, tile_m=256 -> 2x136, not 256+pad).
    """
    m8 = _round_up(max(batch, 1), 8)
    tile_m = max(_round_up(tile_m, 8), 8)
    if m8 <= tile_m:
        if m8 >= 2 * min_rows_per_core:
            return _round_up(-(-m8 // 2), 8)
        return m8
    n_tiles = -(-m8 // tile_m)
    return _round_up(-(-m8 // n_tiles), 8)


def actor_forward(x, params, max_action, action_dim, *, tile_m=1024,
                  min_rows_per_core=256, out_dtype=jnp.float32):
    """Fused Actor forward. x: (batch, state_dim) f32.
    Returns (batch, action_dim) in `out_dtype` (bf16 halves writeback traffic
    if downstream tolerates it)."""
    w1, b1, w2, b2, w3, b3 = params
    batch, state_dim = x.shape
    s_pad = w1.shape[0]

    tm = _choose_tm(batch, tile_m, min_rows_per_core)
    m_pad = _round_up(batch, tm)
    grid_m = m_pad // tm

    # Pad batch (to a tile multiple) and the feature dim (to s_pad) with
    # zeros; cast to bf16 for the MXU.
    x_p = jnp.zeros((m_pad, s_pad), jnp.float32).at[:batch, :state_dim].set(x)
    x_p = x_p.astype(jnp.bfloat16)

    kernel = functools.partial(actor_kernel, max_action=float(max_action))

    # Weights / biases: constant index_map -> VMEM-resident across batch tiles.
    const = lambda shape: pl.BlockSpec(shape, lambda i: (0, 0))
    in_specs = [
        pl.BlockSpec((tm, s_pad), lambda i: (i, 0)),    # x (last dim = full dim)
        const((s_pad, H1_PAD)), const((1, H1_PAD)),     # w1, b1
        const((H1_PAD, H2_PAD)), const((1, H2_PAD)),    # w2, b2
        const((H2_PAD, OUT_PAD)), const((1, OUT_PAD)),  # w3, b3
    ]
    out_spec = pl.BlockSpec((tm, OUT_PAD), lambda i: (i, 0))

    flops = 2 * m_pad * (s_pad * H1_PAD + H1_PAD * H2_PAD + H2_PAD * OUT_PAD)
    bytes_accessed = (x_p.size * x_p.dtype.itemsize
                      + sum(int(p.size) * p.dtype.itemsize for p in params)
                      + m_pad * OUT_PAD * jnp.dtype(out_dtype).itemsize)
    cost = pl.CostEstimate(flops=flops,
                           transcendentals=m_pad * OUT_PAD,
                           bytes_accessed=bytes_accessed)

    out = pl.pallas_call(
        kernel,
        out_shape=jax.ShapeDtypeStruct((m_pad, OUT_PAD), out_dtype),
        grid=(grid_m,),
        in_specs=in_specs,
        out_specs=out_spec,
        compiler_params=pltpu.CompilerParams(
            dimension_semantics=("parallel",)),
        cost_estimate=cost,
    )(x_p, w1, b1, w2, b2, w3, b3)

    return out[:batch, :action_dim]


def actor_reference(x, params, max_action, action_dim):
    """Pure-JAX reference on the same (padded, bf16-cast) parameters."""
    w1, b1, w2, b2, w3, b3 = params
    state_dim = x.shape[1]
    w1f = w1.astype(jnp.float32)[:state_dim, :]
    w2f = w2.astype(jnp.float32)
    w3f = w3.astype(jnp.float32)
    xb = x.astype(jnp.bfloat16).astype(jnp.float32)
    h = jax.nn.leaky_relu(xb @ w1f + b1, negative_slope=LEAKY_SLOPE)
    h = jax.nn.leaky_relu(h.astype(jnp.bfloat16).astype(jnp.float32) @ w2f + b2,
                          negative_slope=LEAKY_SLOPE)
    y = max_action * jnp.tanh(
        h.astype(jnp.bfloat16).astype(jnp.float32) @ w3f + b3)
    return y[:, :action_dim]


if __name__ == "__main__":
    # Small synthetic shapes consistent with the module: flat observation
    # vector per sample (BallGameEnv gives a 1-D obs space), small continuous
    # action space.
    batch = 4
    state_dim = 32
    action_dim = 4
    max_action = 1.0

    key = jax.random.PRNGKey(0)
    k_params, k_x = jax.random.split(key)
    params = init_actor_params(k_params, state_dim, action_dim)

    # Case 1: tiny batch -> single grid step.
    x = jax.random.normal(k_x, (batch, state_dim), dtype=jnp.float32)
    out = jax.block_until_ready(actor_forward(x, params, max_action, action_dim))
    ref = actor_reference(x, params, max_action, action_dim)
    assert out.shape == (batch, action_dim)
    assert jnp.allclose(out, ref, atol=2e-4, rtol=2e-4), (
        f"max abs err {jnp.max(jnp.abs(out - ref))}")

    # Case 2: exercise the balanced multi-tile ("parallel" grid) path cheaply.
    x2 = jax.random.normal(jax.random.PRNGKey(1), (12, state_dim), jnp.float32)
    out2 = jax.block_until_ready(
        actor_forward(x2, params, max_action, action_dim, tile_m=8,
                      min_rows_per_core=8))
    ref2 = actor_reference(x2, params, max_action, action_dim)
    assert out2.shape == (12, action_dim)
    assert jnp.allclose(out2, ref2, atol=2e-4, rtol=2e-4), (
        f"max abs err {jnp.max(jnp.abs(out2 - ref2))}")

    print("KERNEL_OK")
</pallas_src>

<mosaic_0001>
module attributes {stable_mosaic.version = 11 : i64} {
  func.func @actor_kernel(%arg0: i32, %arg1: memref<8x32xbf16, #tpu.memory_space<vmem>>, %arg2: memref<32x512xbf16, #tpu.memory_space<vmem>>, %arg3: memref<1x512xf32, #tpu.memory_space<vmem>>, %arg4: memref<512x384xbf16, #tpu.memory_space<vmem>>, %arg5: memref<1x384xf32, #tpu.memory_space<vmem>>, %arg6: memref<384x128xbf16, #tpu.memory_space<vmem>>, %arg7: memref<1x128xf32, #tpu.memory_space<vmem>>, %arg8: memref<8x128xf32, #tpu.memory_space<vmem>>) attributes {dimension_semantics = [#tpu.dimension_semantics<parallel>], iteration_bounds = array<i64: 1>, scalar_prefetch = 0 : i64, scratch_operands = 0 : i64, tpu.core_type = #tpu.core_type<tc>, window_params = [{transform_indices = @transform_0, window_bounds = array<i64: 8, 32>}, {pipeline_mode = #tpu.pipeline_mode<synchronous>, transform_indices = @transform_1, window_bounds = array<i64: 32, 512>}, {pipeline_mode = #tpu.pipeline_mode<synchronous>, transform_indices = @transform_2, window_bounds = array<i64: 1, 512>}, {pipeline_mode = #tpu.pipeline_mode<synchronous>, transform_indices = @transform_3, window_bounds = array<i64: 512, 384>}, {pipeline_mode = #tpu.pipeline_mode<synchronous>, transform_indices = @transform_4, window_bounds = array<i64: 1, 384>}, {pipeline_mode = #tpu.pipeline_mode<synchronous>, transform_indices = @transform_5, window_bounds = array<i64: 384, 128>}, {pipeline_mode = #tpu.pipeline_mode<synchronous>, transform_indices = @transform_6, window_bounds = array<i64: 1, 128>}, {transform_indices = @transform_7, window_bounds = array<i64: 8, 128>}]} {
    %c0 = arith.constant 0 : index
    %c0_0 = arith.constant 0 : index
    %0 = vector.load %arg1[%c0, %c0_0] : memref<8x32xbf16, #tpu.memory_space<vmem>>, vector<8x32xbf16>
    %c0_1 = arith.constant 0 : index
    %c0_2 = arith.constant 0 : index
    %1 = vector.load %arg2[%c0_1, %c0_2] : memref<32x512xbf16, #tpu.memory_space<vmem>>, vector<32x512xbf16>
    %cst = arith.constant dense<0.000000e+00> : vector<8x512xf32>
    %2 = tpu.matmul %0, %1, %cst {dimension_numbers = #tpu.dot_dimension_numbers<[1], [0], [0], [1], [0, 0, 1, 1], [], []>} : vector<8x32xbf16>, vector<32x512xbf16>, vector<8x512xf32> -> vector<8x512xf32>
    %c0_3 = arith.constant 0 : index
    %c0_4 = arith.constant 0 : index
    %3 = vector.load %arg3[%c0_3, %c0_4] : memref<1x512xf32, #tpu.memory_space<vmem>>, vector<1x512xf32>
    %4 = vector.broadcast %3 : vector<1x512xf32> to vector<8x512xf32>
    %5 = arith.addf %2, %4 : vector<8x512xf32>
    %cst_5 = arith.constant 0.000000e+00 : f32
    %6 = vector.broadcast %cst_5 : f32 to vector<8x512xf32>
    %7 = arith.cmpf oge, %5, %6 : vector<8x512xf32>
    %cst_6 = arith.constant 0.00999999977 : f32
    %8 = vector.broadcast %cst_6 : f32 to vector<8x512xf32>
    %9 = arith.mulf %8, %5 : vector<8x512xf32>
    %10 = arith.select %7, %5, %9 : vector<8x512xi1>, vector<8x512xf32>
    %11 = arith.truncf %10 : vector<8x512xf32> to vector<8x512xbf16>
    %c0_7 = arith.constant 0 : index
    %c0_8 = arith.constant 0 : index
    %12 = vector.load %arg4[%c0_7, %c0_8] : memref<512x384xbf16, #tpu.memory_space<vmem>>, vector<512x384xbf16>
    %cst_9 = arith.constant dense<0.000000e+00> : vector<8x384xf32>
    %13 = tpu.matmul %11, %12, %cst_9 {dimension_numbers = #tpu.dot_dimension_numbers<[1], [0], [0], [1], [0, 0, 1, 1], [], []>} : vector<8x512xbf16>, vector<512x384xbf16>, vector<8x384xf32> -> vector<8x384xf32>
    %c0_10 = arith.constant 0 : index
    %c0_11 = arith.constant 0 : index
    %14 = vector.load %arg5[%c0_10, %c0_11] : memref<1x384xf32, #tpu.memory_space<vmem>>, vector<1x384xf32>
    %15 = vector.broadcast %14 : vector<1x384xf32> to vector<8x384xf32>
    %16 = arith.addf %13, %15 : vector<8x384xf32>
    %cst_12 = arith.constant 0.000000e+00 : f32
    %17 = vector.broadcast %cst_12 : f32 to vector<8x384xf32>
    %18 = arith.cmpf oge, %16, %17 : vector<8x384xf32>
    %cst_13 = arith.constant 0.00999999977 : f32
    %19 = vector.broadcast %cst_13 : f32 to vector<8x384xf32>
    %20 = arith.mulf %19, %16 : vector<8x384xf32>
    %21 = arith.select %18, %16, %20 : vector<8x384xi1>, vector<8x384xf32>
    %22 = arith.truncf %21 : vector<8x384xf32> to vector<8x384xbf16>
    %c0_14 = arith.constant 0 : index
    %c0_15 = arith.constant 0 : index
    %23 = vector.load %arg6[%c0_14, %c0_15] : memref<384x128xbf16, #tpu.memory_space<vmem>>, vector<384x128xbf16>
    %cst_16 = arith.constant dense<0.000000e+00> : vector<8x128xf32>
    %24 = tpu.matmul %22, %23, %cst_16 {dimension_numbers = #tpu.dot_dimension_numbers<[1], [0], [0], [1], [0, 0, 1, 1], [], []>} : vector<8x384xbf16>, vector<384x128xbf16>, vector<8x128xf32> -> vector<8x128xf32>
    %c0_17 = arith.constant 0 : index
    %c0_18 = arith.constant 0 : index
    %25 = vector.load %arg7[%c0_17, %c0_18] : memref<1x128xf32, #tpu.memory_space<vmem>>, vector<1x128xf32>
    %26 = vector.broadcast %25 : vector<1x128xf32> to vector<8x128xf32>
    %27 = arith.addf %24, %26 : vector<8x128xf32>
    %28 = math.tanh %27 : vector<8x128xf32>
    %cst_19 = arith.constant 1.000000e+00 : f32
    %29 = vector.broadcast %cst_19 : f32 to vector<8x128xf32>
    %30 = arith.mulf %29, %28 : vector<8x128xf32>
    %c0_20 = arith.constant 0 : index
    %c0_21 = arith.constant 0 : index
    %31 = vector.load %arg8[%c0_20, %c0_21] : memref<8x128xf32, #tpu.memory_space<vmem>>, vector<8x128xf32>
    tpu.vector_store %arg8[%c0_20, %c0_21], %30 {strides = array<i32>} : memref<8x128xf32, #tpu.memory_space<vmem>>, vector<8x128xf32>,
    return
  }
  func.func @transform_0(%arg0: i32) -> (i32, i32) {
    %c0_i32 = arith.constant 0 : i32
    %c0_i32_0 = arith.constant 0 : i32
    return %arg0, %c0_i32 : i32, i32
  }
  func.func @transform_1(%arg0: i32) -> (i32, i32) {
    %c0_i32 = arith.constant 0 : i32
    %c0_i32_0 = arith.constant 0 : i32
    %c0_i32_1 = arith.constant 0 : i32
    return %c0_i32, %c0_i32_0 : i32, i32
  }
  func.func @transform_2(%arg0: i32) -> (i32, i32) {
    %c0_i32 = arith.constant 0 : i32
    %c0_i32_0 = arith.constant 0 : i32
    %c0_i32_1 = arith.constant 0 : i32
    return %c0_i32, %c0_i32_0 : i32, i32
  }
  func.func @transform_3(%arg0: i32) -> (i32, i32) {
    %c0_i32 = arith.constant 0 : i32
    %c0_i32_0 = arith.constant 0 : i32
    %c0_i32_1 = arith.constant 0 : i32
    return %c0_i32, %c0_i32_0 : i32, i32
  }
  func.func @transform_4(%arg0: i32) -> (i32, i32) {
    %c0_i32 = arith.constant 0 : i32
    %c0_i32_0 = arith.constant 0 : i32
    %c0_i32_1 = arith.constant 0 : i32
    return %c0_i32, %c0_i32_0 : i32, i32
  }
  func.func @transform_5(%arg0: i32) -> (i32, i32) {
    %c0_i32 = arith.constant 0 : i32
    %c0_i32_0 = arith.constant 0 : i32
    %c0_i32_1 = arith.constant 0 : i32
    return %c0_i32, %c0_i32_0 : i32, i32
  }
  func.func @transform_6(%arg0: i32) -> (i32, i32) {
    %c0_i32 = arith.constant 0 : i32
    %c0_i32_0 = arith.constant 0 : i32
    %c0_i32_1 = arith.constant 0 : i32
    return %c0_i32, %c0_i32_0 : i32, i32
  }
  func.func @transform_7(%arg0: i32) -> (i32, i32) {
    %c0_i32 = arith.constant 0 : i32
    %c0_i32_0 = arith.constant 0 : i32
    return %arg0, %c0_i32 : i32, i32
  }
}

</mosaic_0001>

<llo_original>
// kernel: tpu_custom_call.1
$region0: #{tpu_custom_call.1}
  #allocation0 [shape = 'u32[]', space=smem, size = 0x4, offset = 0x4, fixed_abs, tag = 'smem constant byte address 0x4 - core index']
  #allocation1 [shape = 'u32[144,128]{1,0:T(1,128)}', space=vmem, size = 0x12000, scoped, tag = 'internal scratch']
  %s0 = inlined_call_operand.hbm [shape: bf16[8,32], index: 0, kind: input, shape index: {}]
  %s1 = inlined_call_operand.hbm [shape: bf16[32,512], index: 1, kind: input, shape index: {}]
  %s2 = inlined_call_operand.vmem [shape: f32[1,512], index: 2, kind: input, shape index: {}]
  %s3 = inlined_call_operand.hbm [shape: bf16[512,384], index: 3, kind: input, shape index: {}]
  %s4 = inlined_call_operand.vmem [shape: f32[1,384], index: 4, kind: input, shape index: {}]
  %s5 = inlined_call_operand.hbm [shape: bf16[384,128], index: 5, kind: input, shape index: {}]
  %s6 = inlined_call_operand.vmem [shape: f32[1,128], index: 6, kind: input, shape index: {}]
  %s7 = inlined_call_operand.hbm [shape: f32[8,128], index: 7, kind: output, shape index: {}]
  %s8 = sld [smem:[#allocation0]]
  $region54: #{tpu_custom_call.1} parent=0
    _
  %s10 = ssub.s32 1, %s8
  %s11 = scalar_select 0, %s10, %s8
  $region1: #{tpu_custom_call.1} parent=0
    #allocation2 [shape = 'u8[2048]{0}', space=vmem, size = 0x800, scoped, tag = 'input window, operand 0, single buffered']
    #allocation3 [shape = 's32[1]{0}', space=sflag, size = 0x4, scoped, tag = 'scoped memory for tpu_custom_call.1']
    #allocation4 [shape = 's32[1]{0}', space=sflag, size = 0x4, scoped, tag = 'scoped memory for tpu_custom_call.1']
    #allocation5 [shape = 'u8[32768]{0}', space=vmem, size = 0x8000, scoped, tag = 'input window, operand 1, single buffered']
    #allocation6 [shape = 's32[1]{0}', space=sflag, size = 0x4, scoped, tag = 'scoped memory for tpu_custom_call.1']
    #allocation7 [shape = 'u8[393216]{0}', space=vmem, size = 0x60000, scoped, tag = 'input window, operand 3, single buffered']
    #allocation8 [shape = 'u8[98304]{0}', space=vmem, size = 0x18000, scoped, tag = 'input window, operand 5, single buffered']
    #allocation9 [shape = 's32[1]{0}', space=sflag, size = 0x4, scoped, tag = 'scoped memory for tpu_custom_call.1']
    #allocation10 [shape = 'u8[4096]{0}', space=vmem, size = 0x1000, scoped, tag = 'output window, operand 0, single buffered']
    %12 = vsyncpa [#allocation3], 0
    %13 = vsyncpa [#allocation6], 0
    %14 = vsyncpa [#allocation9], 0
    %15 = vsyncpa [#allocation4], 0
    // Predicated region
    $region2: #{tpu_custom_call.1} parent=1 // pred_check
      _
    $region3: #{tpu_custom_call.1} parent=1 // pred_check_branch
      %17 = sbr.rel (0) target = $region5
    $region4: #{tpu_custom_call.1} parent=1 // pred_region
      %s19 = ssub.s32 64, 64
      %20 = vsyncadd [#allocation3], %s19
      %s22 = sshll.u32 [#allocation2], 4
      %s23 = int_to_ptr.vmem [resolvable:$true] %s22
      %25 = dma.hbm_to_vmem [thread:$0]  %s0, 64, %s23, [#allocation3]
    $region5: #{tpu_custom_call.1} parent=1 // pred_fallthru
      _
    // Predicated region
    $region6: #{tpu_custom_call.1} parent=1 // pred_check
      _
    $region7: #{tpu_custom_call.1} parent=1 // pred_check_branch
      %27 = sbr.rel (0) target = $region9
    $region8: #{tpu_custom_call.1} parent=1 // pred_region
      %s29 = ssub.s32 1024, 1024
      %30 = vsyncadd [#allocation6], %s29
      %s31 = sshll.u32 [#allocation5], 4
      %s32 = int_to_ptr.vmem [resolvable:$true] %s31
      %37 = dma.hbm_to_vmem [thread:$0]  %s1, 1024, %s32, [#allocation6], 256, 256, 16
    $region9: #{tpu_custom_call.1} parent=1 // pred_fallthru
      _
    // Predicated region
    $region10: #{tpu_custom_call.1} parent=1 // pred_check
      _
    $region11: #{tpu_custom_call.1} parent=1 // pred_check_branch
      %39 = sbr.rel (0) target = $region13
    $region12: #{tpu_custom_call.1} parent=1 // pred_region
      _
    $region13: #{tpu_custom_call.1} parent=1 // pred_fallthru
      _
    // Predicated region
    $region14: #{tpu_custom_call.1} parent=1 // pred_check
      _
    $region15: #{tpu_custom_call.1} parent=1 // pred_check_branch
      %41 = sbr.rel (0) target = $region17
    $region16: #{tpu_custom_call.1} parent=1 // pred_region
      %s43 = ssub.s32 12288, 12288
      %44 = vsyncadd [#allocation6], %s43
      %s45 = sshll.u32 [#allocation7], 4
      %s46 = int_to_ptr.vmem [resolvable:$true] %s45
      %51 = dma.hbm_to_vmem [thread:$0]  %s3, 12288, %s46, [#allocation6], 192, 192, 12
    $region17: #{tpu_custom_call.1} parent=1 // pred_fallthru
      _
    // Predicated region
    $region18: #{tpu_custom_call.1} parent=1 // pred_check
      _
    $region19: #{tpu_custom_call.1} parent=1 // pred_check_branch
      %53 = sbr.rel (0) target = $region21
    $region20: #{tpu_custom_call.1} parent=1 // pred_region
      _
    $region21: #{tpu_custom_call.1} parent=1 // pred_fallthru
      _
    // Predicated region
    $region22: #{tpu_custom_call.1} parent=1 // pred_check
      _
    $region23: #{tpu_custom_call.1} parent=1 // pred_check_branch
      %55 = sbr.rel (0) target = $region25
    $region24: #{tpu_custom_call.1} parent=1 // pred_region
      %s57 = ssub.s32 3072, 3072
      %58 = vsyncadd [#allocation9], %s57
      %s59 = sshll.u32 [#allocation8], 4
      %s60 = int_to_ptr.vmem [resolvable:$true] %s59
      %65 = dma.hbm_to_vmem [thread:$0]  %s5, 3072, %s60, [#allocation9], 64, 64, 4
    $region25: #{tpu_custom_call.1} parent=1 // pred_fallthru
      _
    // Predicated region
    $region26: #{tpu_custom_call.1} parent=1 // pred_check
      _
    $region27: #{tpu_custom_call.1} parent=1 // pred_check_branch
      %67 = sbr.rel (0) target = $region29
    $region28: #{tpu_custom_call.1} parent=1 // pred_region
      _
    $region29: #{tpu_custom_call.1} parent=1 // pred_fallthru
      _
    // Predicated region
    $region30: #{tpu_custom_call.1} parent=1 // pred_check
      _
    $region31: #{tpu_custom_call.1} parent=1 // pred_check_branch
      %69 = sbr.rel (0) target = $region33
    $region32: #{tpu_custom_call.1} parent=1 // pred_region
      %70 = dma.done [#allocation3], 64
    $region33: #{tpu_custom_call.1} parent=1 // pred_fallthru
      _
    // Predicated region
    $region34: #{tpu_custom_call.1} parent=1 // pred_check
      _
    $region35: #{tpu_custom_call.1} parent=1 // pred_check_branch
      %72 = sbr.rel (0) target = $region37
    $region36: #{tpu_custom_call.1} parent=1 // pred_region
      %73 = dma.done [#allocation6], 1024
    $region37: #{tpu_custom_call.1} parent=1 // pred_fallthru
      _
    // Predicated region
    $region38: #{tpu_custom_call.1} parent=1 // pred_check
      _
    $region39: #{tpu_custom_call.1} parent=1 // pred_check_branch
      %75 = sbr.rel (0) target = $region41
    $region40: #{tpu_custom_call.1} parent=1 // pred_region
      %76 = dma.done [#allocation6], 12288
    $region41: #{tpu_custom_call.1} parent=1 // pred_fallthru
      _
    // Predicated region
    $region42: #{tpu_custom_call.1} parent=1 // pred_check
      _
    $region43: #{tpu_custom_call.1} parent=1 // pred_check_branch
      %78 = sbr.rel (0) target = $region45
    $region44: #{tpu_custom_call.1} parent=1 // pred_region
      %79 = dma.done [#allocation9], 3072
    $region45: #{tpu_custom_call.1} parent=1 // pred_fallthru
      _
    %v81 = vld [vmem:[#allocation2] sm:$0xf]
    %v82 = vld [vmem:[#allocation5] sm:$0xff]
    %v83 = vld [vmem:[#allocation5 + $0x8] sm:$0xff]
    %v84 = vld [vmem:[#allocation5 + $0x10] sm:$0xff]
    %v85 = vld [vmem:[#allocation5 + $0x18] sm:$0xff]
    %v86 = vld [vmem:[#allocation5 + $0x20] sm:$0xff]
    %v87 = vld [vmem:[#allocation5 + $0x28] sm:$0xff]
    %v88 = vld [vmem:[#allocation5 + $0x30] sm:$0xff]
    %v89 = vld [vmem:[#allocation5 + $0x38] sm:$0xff]
    %v90 = vld [vmem:[%s2] sm:$0xf]
    %v92 = vlaneseq
    %v93 = vshrl.u32 %v92, 7
    %v94 = vsub.s32 0, %v93
    %v95 = vrot.slane %v90, %v94
    %v96 = vlaneseq
    %v97 = vshrl.u32 %v96, 7
    %v98 = vsub.s32 1, %v97
    %v99 = vrot.slane %v90, %v98
    %v100 = vlaneseq
    %v101 = vshrl.u32 %v100, 7
    %v102 = vsub.s32 2, %v101
    %v103 = vrot.slane %v90, %v102
    %v104 = vlaneseq
    %v105 = vshrl.u32 %v104, 7
    %v106 = vsub.s32 3, %v105
    %v107 = vrot.slane %v90, %v106
    %v120 = vunpack.c.l.b16 %v82
    %v121 = vunpack.c.h.b16 %v82
    %v122 = vunpack.c.l.b16 %v83
    %v123 = vunpack.c.h.b16 %v83
    %v124 = vunpack.c.l.b16 %v84
    %v125 = vunpack.c.h.b16 %v84
    %v126 = vunpack.c.l.b16 %v85
    %v127 = vunpack.c.h.b16 %v85
    %v128 = vunpack.c.l.b16 %v86
    %v129 = vunpack.c.h.b16 %v86
    %v130 = vunpack.c.l.b16 %v87
    %v131 = vunpack.c.h.b16 %v87
    %v132 = vunpack.c.l.b16 %v88
    %v133 = vunpack.c.h.b16 %v88
    %v134 = vunpack.c.l.b16 %v89
    %v135 = vunpack.c.h.b16 %v89
    %v136 = vpack.c.b16 %v124, %v120
    %v137 = vpack.c.b16 %v125, %v121
    %v138 = vpack.c.b16 %v126, %v122
    %v139 = vpack.c.b16 %v127, %v123
    %v140 = vpack.c.b16 %v132, %v128
    %v141 = vpack.c.b16 %v133, %v129
    %v142 = vpack.c.b16 %v134, %v130
    %v143 = vpack.c.b16 %v135, %v131
    %vm152 = vcmask 261120
    %v154 = vsel %vm152, %v81, 0
    %156 = vmatprep.subr.bf16.mxu0 %v137
    %157 = vmatpush1.bf16.msra.mxu0 %v136
    %158 = vmatprep.subr.bf16.mxu0 %v141
    %159 = vmatpush1.bf16.msra.mxu0 %v140
    %160 = vmatprep.subr.bf16.mxu0 0
    %161 = vmatpush1.bf16.msra.mxu0 0
    %162 = vmatprep.subr.bf16.mxu0 0
    %163 = vmatpush1.bf16.msra.mxu0 0
    %164 = vmatprep.subr.bf16.mxu0 0
    %165 = vmatpush1.bf16.msra.mxu0 0
    %166 = vmatprep.subr.bf16.mxu0 0
    %167 = vmatpush1.bf16.msra.mxu0 0
    %168 = vmatprep.subr.bf16.mxu0 0
    %169 = vmatpush1.bf16.msra.mxu0 0
    %170 = vmatprep.subr.bf16.mxu0 0
    %171 = vmatpush1.bf16.msra.mxu0 0
    %172 = vmatprep.subr.bf16.mxu0 0
    %173 = vmatpush1.bf16.msra.mxu0 0
    %174 = vmatprep.subr.bf16.mxu0 0
    %175 = vmatpush1.bf16.msra.mxu0 0
    %176 = vmatprep.subr.bf16.mxu0 0
    %177 = vmatpush1.bf16.msra.mxu0 0
    %178 = vmatprep.subr.bf16.mxu0 0
    %179 = vmatpush1.bf16.msra.mxu0 0
    %180 = vmatprep.subr.bf16.mxu0 0
    %181 = vmatpush1.bf16.msra.mxu0 0
    %182 = vmatprep.subr.bf16.mxu0 0
    %183 = vmatpush1.bf16.msra.mxu0 0
    %184 = vmatprep.subr.bf16.mxu0 0
    %185 = vmatpush1.bf16.msra.mxu0 0
    %186 = vmatprep.subr.bf16.mxu0 0
    %187 = vmatpush1.bf16.msra.mxu0 0
    %188 = vmatprep.mubr.bf16.mxu0 0
    %189 = vmatmul.mubr.bf16.gmra.mrb[0].mxu0 %v154
    %v190 = vpop.f32.mrb[0].mxu0
    %v191 = vadd.f32 %v95, %v190
    %v192 = vpop.f32.mrb[0].mxu0
    %v193 = vadd.f32 %v99, %v192
    %v194 = vpop.f32.mrb[0].mxu0
    %v195 = vpop.f32.mrb[0].mxu0
    %196 = vdwg.mxu0
    %197 = vmatprep.subr.bf16.mxu0 %v139
    %198 = vmatpush1.bf16.msra.mxu0 %v138
    %199 = vmatprep.subr.bf16.mxu0 %v143
    %200 = vmatpush1.bf16.msra.mxu0 %v142
    %201 = vmatprep.subr.bf16.mxu0 0
    %202 = vmatpush1.bf16.msra.mxu0 0
    %203 = vmatprep.subr.bf16.mxu0 0
    %204 = vmatpush1.bf16.msra.mxu0 0
    %205 = vmatprep.subr.bf16.mxu0 0
    %206 = vmatpush1.bf16.msra.mxu0 0
    %207 = vmatprep.subr.bf16.mxu0 0
    %208 = vmatpush1.bf16.msra.mxu0 0
    %209 = vmatprep.subr.bf16.mxu0 0
    %210 = vmatpush1.bf16.msra.mxu0 0
    %211 = vmatprep.subr.bf16.mxu0 0
    %212 = vmatpush1.bf16.msra.mxu0 0
    %213 = vmatprep.subr.bf16.mxu0 0
    %214 = vmatpush1.bf16.msra.mxu0 0
    %215 = vmatprep.subr.bf16.mxu0 0
    %216 = vmatpush1.bf16.msra.mxu0 0
    %217 = vmatprep.subr.bf16.mxu0 0
    %218 = vmatpush1.bf16.msra.mxu0 0
    %219 = vmatprep.subr.bf16.mxu0 0
    %220 = vmatpush1.bf16.msra.mxu0 0
    %221 = vmatprep.subr.bf16.mxu0 0
    %222 = vmatpush1.bf16.msra.mxu0 0
    %223 = vmatprep.subr.bf16.mxu0 0
    %224 = vmatpush1.bf16.msra.mxu0 0
    %225 = vmatprep.subr.bf16.mxu0 0
    %226 = vmatpush1.bf16.msra.mxu0 0
    %227 = vmatprep.subr.bf16.mxu0 0
    %228 = vmatpush1.bf16.msra.mxu0 0
    %229 = vmatprep.mubr.bf16.mxu0 0
    %230 = vmatmul.mubr.bf16.gmra.mrb[0].mxu0 %v154
    %v231 = vpop.f32.mrb[0].mxu0
    %v232 = vadd.f32 %v103, %v231
    %v233 = vpop.f32.mrb[0].mxu0
    %v234 = vadd.f32 %v107, %v233
    %v235 = vpop.f32.mrb[0].mxu0
    %v236 = vpop.f32.mrb[0].mxu0
    %237 = vdwg.mxu0
    %vm238 = vcmp.ge.f32.partialorder %v191, 0.0
    %vm239 = vcmp.ge.f32.partialorder %v193, 0.0
    %vm240 = vcmp.ge.f32.partialorder %v232, 0.0
    %vm241 = vcmp.ge.f32.partialorder %v234, 0.0
    %v242 = vmul.f32 %v191, 0.01
    %v243 = vmul.f32 %v193, 0.01
    %v244 = vmul.f32 %v232, 0.01
    %v245 = vmul.f32 %v234, 0.01
    %v246 = vsel %vm238, %v191, %v242
    %v247 = vsel %vm239, %v193, %v243
    %v248 = vsel %vm240, %v232, %v244
    %v249 = vsel %vm241, %v234, %v245
    %v250 = vpack.c.bf16 %v246, %v246
    %v251 = vpack.c.bf16 %v247, %v247
    %v252 = vpack.c.bf16 %v248, %v248
    %v253 = vpack.c.bf16 %v249, %v249
    %v254 = vld [vmem:[#allocation7] sm:$0xff]
    %v255 = vld [vmem:[#allocation7 + $0x8] sm:$0xf]
    %v256 = vld [vmem:[#allocation7 + $0xc] sm:$0xff]
    %v257 = vld [vmem:[#allocation7 + $0x14] sm:$0xf]
    %v258 = vld [vmem:[#allocation7 + $0x18] sm:$0xff]
    %v259 = vld [vmem:[#allocation7 + $0x20] sm:$0xf]
    %v260 = vld [vmem:[#allocation7 + $0x24] sm:$0xff]
    %v261 = vld [vmem:[#allocation7 + $0x2c] sm:$0xf]
    %v262 = vld [vmem:[#allocation7 + $0x30] sm:$0xff]
    %v263 = vld [vmem:[#allocation7 + $0x38] sm:$0xf]
    %v264 = vld [vmem:[#allocation7 + $0x3c] sm:$0xff]
    %v265 = vld [vmem:[#allocation7 + $0x44] sm:$0xf]
    %v266 = vld [vmem:[#allocation7 + $0x48] sm:$0xff]
    %v267 = vld [vmem:[#allocation7 + $0x50] sm:$0xf]
    %v268 = vld [vmem:[#allocation7 + $0x54] sm:$0xff]
    %v269 = vld [vmem:[#allocation7 + $0x5c] sm:$0xf]
    %v270 = vld [vmem:[#allocation7 + $0x60] sm:$0xff]
    %v271 = vld [vmem:[#allocation7 + $0x68] sm:$0xf]
    %v272 = vld [vmem:[#allocation7 + $0x6c] sm:$0xff]
    %v273 = vld [vmem:[#allocation7 + $0x74] sm:$0xf]
    %v274 = vld [vmem:[#allocation7 + $0x78] sm:$0xff]
    %v275 = vld [vmem:[#allocation7 + $0x80] sm:$0xf]
    %v276 = vld [vmem:[#allocation7 + $0x84] sm:$0xff]
    %v277 = vld [vmem:[#allocation7 + $0x8c] sm:$0xf]
    %v278 = vld [vmem:[#allocation7 + $0x90] sm:$0xff]
    %v279 = vld [vmem:[#allocation7 + $0x98] sm:$0xf]
    %v280 = vld [vmem:[#allocation7 + $0x9c] sm:$0xff]
    %v281 = vld [vmem:[#allocation7 + $0xa4] sm:$0xf]
    %v282 = vld [vmem:[#allocation7 + $0xa8] sm:$0xff]
    %v283 = vld [vmem:[#allocation7 + $0xb0] sm:$0xf]
    %v284 = vld [vmem:[#allocation7 + $0xb4] sm:$0xff]
    %v285 = vld [vmem:[#allocation7 + $0xbc] sm:$0xf]
    %v286 = vld [vmem:[#allocation7 + $0xc0] sm:$0xff]
    %v287 = vld [vmem:[#allocation7 + $0xc8] sm:$0xf]
    %v288 = vld [vmem:[#allocation7 + $0xcc] sm:$0xff]
    %v289 = vld [vmem:[#allocation7 + $0xd4] sm:$0xf]
    %v290 = vld [vmem:[#allocation7 + $0xd8] sm:$0xff]
    %v291 = vld [vmem:[#allocation7 + $0xe0] sm:$0xf]
    %v292 = vld [vmem:[#allocation7 + $0xe4] sm:$0xff]
    %v293 = vld [vmem:[#allocation7 + $0xec] sm:$0xf]
    %v294 = vld [vmem:[#allocation7 + $0xf0] sm:$0xff]
    %v295 = vld [vmem:[#allocation7 + $0xf8] sm:$0xf]
    %v296 = vld [vmem:[#allocation7 + $0xfc] sm:$0xff]
    %v297 = vld [vmem:[#allocation7 + $0x104] sm:$0xf]
    %v298 = vld [vmem:[#allocation7 + $0x108] sm:$0xff]
    %v299 = vld [vmem:[#allocation7 + $0x110] sm:$0xf]
    %v300 = vld [vmem:[#allocation7 + $0x114] sm:$0xff]
    %v301 = vld [vmem:[#allocation7 + $0x11c] sm:$0xf]
    %v302 = vld [vmem:[#allocation7 + $0x120] sm:$0xff]
    %v303 = vld [vmem:[#allocation7 + $0x128] sm:$0xf]
    %v304 = vld [vmem:[#allocation7 + $0x12c] sm:$0xff]
    %v305 = vld [vmem:[#allocation7 + $0x134] sm:$0xf]
    %v306 = vld [vmem:[#allocation7 + $0x138] sm:$0xff]
    %v307 = vld [vmem:[#allocation7 + $0x140] sm:$0xf]
    %v308 = vld [vmem:[#allocation7 + $0x144] sm:$0xff]
    %v309 = vld [vmem:[#allocation7 + $0x14c] sm:$0xf]
    %v310 = vld [vmem:[#allocation7 + $0x150] sm:$0xff]
    %v311 = vld [vmem:[#allocation7 + $0x158] sm:$0xf]
    %v312 = vld [vmem:[#allocation7 + $0x15c] sm:$0xff]
    %v313 = vld [vmem:[#allocation7 + $0x164] sm:$0xf]
    %v314 = vld [vmem:[#allocation7 + $0x168] sm:$0xff]
    %v315 = vld [vmem:[#allocation7 + $0x170] sm:$0xf]
    %v316 = vld [vmem:[#allocation7 + $0x174] sm:$0xff]
    %v317 = vld [vmem:[#allocation7 + $0x17c] sm:$0xf]
    %v318 = vld [vmem:[#allocation7 + $0x180] sm:$0xff]
    %v319 = vld [vmem:[#allocation7 + $0x188] sm:$0xf]
    %v320 = vld [vmem:[#allocation7 + $0x18c] sm:$0xff]
    %v321 = vld [vmem:[#allocation7 + $0x194] sm:$0xf]
    %v322 = vld [vmem:[#allocation7 + $0x198] sm:$0xff]
    %v323 = vld [vmem:[#allocation7 + $0x1a0] sm:$0xf]
    %v324 = vld [vmem:[#allocation7 + $0x1a4] sm:$0xff]
    %v325 = vld [vmem:[#allocation7 + $0x1ac] sm:$0xf]
    %v326 = vld [vmem:[#allocation7 + $0x1b0] sm:$0xff]
    %v327 = vld [vmem:[#allocation7 + $0x1b8] sm:$0xf]
    %v328 = vld [vmem:[#allocation7 + $0x1bc] sm:$0xff]
    %v329 = vld [vmem:[#allocation7 + $0x1c4] sm:$0xf]
    %v330 = vld [vmem:[#allocation7 + $0x1c8] sm:$0xff]
    %v331 = vld [vmem:[#allocation7 + $0x1d0] sm:$0xf]
    %v332 = vld [vmem:[#allocation7 + $0x1d4] sm:$0xff]
    %v333 = vld [vmem:[#allocation7 + $0x1dc] sm:$0xf]
    %v334 = vld [vmem:[#allocation7 + $0x1e0] sm:$0xff]
    %v335 = vld [vmem:[#allocation7 + $0x1e8] sm:$0xf]
    %v336 = vld [vmem:[#allocation7 + $0x1ec] sm:$0xff]
    %v337 = vld [vmem:[#allocation7 + $0x1f4] sm:$0xf]
    %v338 = vld [vmem:[#allocation7 + $0x1f8] sm:$0xff]
    %v339 = vld [vmem:[#allocation7 + $0x200] sm:$0xf]
    %v340 = vld [vmem:[#allocation7 + $0x204] sm:$0xff]
    %v341 = vld [vmem:[#allocation7 + $0x20c] sm:$0xf]
    %v342 = vld [vmem:[#allocation7 + $0x210] sm:$0xff]
    %v343 = vld [vmem:[#allocation7 + $0x218] sm:$0xf]
    %v344 = vld [vmem:[#allocation7 + $0x21c] sm:$0xff]
    %v345 = vld [vmem:[#allocation7 + $0x224] sm:$0xf]
    %v346 = vld [vmem:[#allocation7 + $0x228] sm:$0xff]
    %v347 = vld [vmem:[#allocation7 + $0x230] sm:$0xf]
    %v348 = vld [vmem:[#allocation7 + $0x234] sm:$0xff]
    %v349 = vld [vmem:[#allocation7 + $0x23c] sm:$0xf]
    %v350 = vld [vmem:[#allocation7 + $0x240] sm:$0xff]
    %v351 = vld [vmem:[#allocation7 + $0x248] sm:$0xf]
    %v352 = vld [vmem:[#allocation7 + $0x24c] sm:$0xff]
    %v353 = vld [vmem:[#allocation7 + $0x254] sm:$0xf]
    %v354 = vld [vmem:[#allocation7 + $0x258] sm:$0xff]
    %v355 = vld [vmem:[#allocation7 + $0x260] sm:$0xf]
    %v356 = vld [vmem:[#allocation7 + $0x264] sm:$0xff]
    %v357 = vld [vmem:[#allocation7 + $0x26c] sm:$0xf]
    %v358 = vld [vmem:[#allocation7 + $0x270] sm:$0xff]
    %v359 = vld [vmem:[#allocation7 + $0x278] sm:$0xf]
    %v360 = vld [vmem:[#allocation7 + $0x27c] sm:$0xff]
    %v361 = vld [vmem:[#allocation7 + $0x284] sm:$0xf]
    %v362 = vld [vmem:[#allocation7 + $0x288] sm:$0xff]
    %v363 = vld [vmem:[#allocation7 + $0x290] sm:$0xf]
    %v364 = vld [vmem:[#allocation7 + $0x294] sm:$0xff]
    %v365 = vld [vmem:[#allocation7 + $0x29c] sm:$0xf]
    %v366 = vld [vmem:[#allocation7 + $0x2a0] sm:$0xff]
    %v367 = vld [vmem:[#allocation7 + $0x2a8] sm:$0xf]
    %v368 = vld [vmem:[#allocation7 + $0x2ac] sm:$0xff]
    %v369 = vld [vmem:[#allocation7 + $0x2b4] sm:$0xf]
    %v370 = vld [vmem:[#allocation7 + $0x2b8] sm:$0xff]
    %v371 = vld [vmem:[#allocation7 + $0x2c0] sm:$0xf]
    %v372 = vld [vmem:[#allocation7 + $0x2c4] sm:$0xff]
    %v373 = vld [vmem:[#allocation7 + $0x2cc] sm:$0xf]
    %v374 = vld [vmem:[#allocation7 + $0x2d0] sm:$0xff]
    %v375 = vld [vmem:[#allocation7 + $0x2d8] sm:$0xf]
    %v376 = vld [vmem:[#allocation7 + $0x2dc] sm:$0xff]
    %v377 = vld [vmem:[#allocation7 + $0x2e4] sm:$0xf]
    %v378 = vld [vmem:[#allocation7 + $0x2e8] sm:$0xff]
    %v379 = vld [vmem:[#allocation7 + $0x2f0] sm:$0xf]
    %v380 = vld [vmem:[#allocation7 + $0x2f4] sm:$0xff]
    %v381 = vld [vmem:[#allocation7 + $0x2fc] sm:$0xf]
    %v382 = vld [vmem:[%s4] sm:$0x7]
    %v384 = vlaneseq
    %v385 = vshrl.u32 %v384, 7
    %v386 = vsub.s32 0, %v385
    %v387 = vrot.slane %v382, %v386
    %v388 = vlaneseq
    %v389 = vshrl.u32 %v388, 7
    %v390 = vsub.s32 1, %v389
    %v391 = vrot.slane %v382, %v390
    %v392 = vlaneseq
    %v393 = vshrl.u32 %v392, 7
    %v394 = vsub.s32 2, %v393
    %v395 = vrot.slane %v382, %v394
    %v527 = vunpack.c.l.b16 %v254
    %v528 = vunpack.c.h.b16 %v254
    %v529 = vunpack.c.l.b16 %v255
    %v530 = vunpack.c.l.b16 %v256
    %v531 = vunpack.c.h.b16 %v256
    %v532 = vunpack.c.l.b16 %v257
    %v533 = vunpack.c.l.b16 %v258
    %v534 = vunpack.c.h.b16 %v258
    %v535 = vunpack.c.l.b16 %v259
    %v536 = vunpack.c.l.b16 %v260
    %v537 = vunpack.c.h.b16 %v260
    %v538 = vunpack.c.l.b16 %v261
    %v539 = vunpack.c.l.b16 %v262
    %v540 = vunpack.c.h.b16 %v262
    %v541 = vunpack.c.l.b16 %v263
    %v542 = vunpack.c.l.b16 %v264
    %v543 = vunpack.c.h.b16 %v264
    %v544 = vunpack.c.l.b16 %v265
    %v545 = vunpack.c.l.b16 %v266
    %v546 = vunpack.c.h.b16 %v266
    %v547 = vunpack.c.l.b16 %v267
    %v548 = vunpack.c.l.b16 %v268
    %v549 = vunpack.c.h.b16 %v268
    %v550 = vunpack.c.l.b16 %v269
    %v551 = vunpack.c.l.b16 %v270
    %v552 = vunpack.c.h.b16 %v270
    %v553 = vunpack.c.l.b16 %v271
    %v554 = vunpack.c.l.b16 %v272
    %v555 = vunpack.c.h.b16 %v272
    %v556 = vunpack.c.l.b16 %v273
    %v557 = vunpack.c.l.b16 %v274
    %v558 = vunpack.c.h.b16 %v274
    %v559 = vunpack.c.l.b16 %v275
    %v560 = vunpack.c.l.b16 %v276
    %v561 = vunpack.c.h.b16 %v276
    %v562 = vunpack.c.l.b16 %v277
    %v563 = vunpack.c.l.b16 %v278
    %v564 = vunpack.c.h.b16 %v278
    %v565 = vunpack.c.l.b16 %v279
    %v566 = vunpack.c.l.b16 %v280
    %v567 = vunpack.c.h.b16 %v280
    %v568 = vunpack.c.l.b16 %v281
    %v569 = vunpack.c.l.b16 %v282
    %v570 = vunpack.c.h.b16 %v282
    %v571 = vunpack.c.l.b16 %v283
    %v572 = vunpack.c.l.b16 %v284
    %v573 = vunpack.c.h.b16 %v284
    %v574 = vunpack.c.l.b16 %v285
    %v575 = vunpack.c.l.b16 %v286
    %v576 = vunpack.c.h.b16 %v286
    %v577 = vunpack.c.l.b16 %v287
    %v578 = vunpack.c.l.b16 %v288
    %v579 = vunpack.c.h.b16 %v288
    %v580 = vunpack.c.l.b16 %v289
    %v581 = vunpack.c.l.b16 %v290
    %v582 = vunpack.c.h.b16 %v290
    %v583 = vunpack.c.l.b16 %v291
    %v584 = vunpack.c.l.b16 %v292
    %v585 = vunpack.c.h.b16 %v292
    %v586 = vunpack.c.l.b16 %v293
    %v587 = vunpack.c.l.b16 %v294
    %v588 = vunpack.c.h.b16 %v294
    %v589 = vunpack.c.l.b16 %v295
    %v590 = vunpack.c.l.b16 %v296
    %v591 = vunpack.c.h.b16 %v296
    %v592 = vunpack.c.l.b16 %v297
    %v593 = vunpack.c.l.b16 %v298
    %v594 = vunpack.c.h.b16 %v298
    %v595 = vunpack.c.l.b16 %v299
    %v596 = vunpack.c.l.b16 %v300
    %v597 = vunpack.c.h.b16 %v300
    %v598 = vunpack.c.l.b16 %v301
    %v599 = vunpack.c.l.b16 %v302
    %v600 = vunpack.c.h.b16 %v302
    %v601 = vunpack.c.l.b16 %v303
    %v602 = vunpack.c.l.b16 %v304
    %v603 = vunpack.c.h.b16 %v304
    %v604 = vunpack.c.l.b16 %v305
    %v605 = vunpack.c.l.b16 %v306
    %v606 = vunpack.c.h.b16 %v306
    %v607 = vunpack.c.l.b16 %v307
    %v608 = vunpack.c.l.b16 %v308
    %v609 = vunpack.c.h.b16 %v308
    %v610 = vunpack.c.l.b16 %v309
    %v611 = vunpack.c.l.b16 %v310
    %v612 = vunpack.c.h.b16 %v310
    %v613 = vunpack.c.l.b16 %v311
    %v614 = vunpack.c.l.b16 %v312
    %v615 = vunpack.c.h.b16 %v312
    %v616 = vunpack.c.l.b16 %v313
    %v617 = vunpack.c.l.b16 %v314
    %v618 = vunpack.c.h.b16 %v314
    %v619 = vunpack.c.l.b16 %v315
    %v620 = vunpack.c.l.b16 %v316
    %v621 = vunpack.c.h.b16 %v316
    %v622 = vunpack.c.l.b16 %v317
    %v623 = vunpack.c.l.b16 %v318
    %v624 = vunpack.c.h.b16 %v318
    %v625 = vunpack.c.l.b16 %v319
    %v626 = vunpack.c.l.b16 %v320
    %v627 = vunpack.c.h.b16 %v320
    %v628 = vunpack.c.l.b16 %v321
    %v629 = vunpack.c.l.b16 %v322
    %v630 = vunpack.c.h.b16 %v322
    %v631 = vunpack.c.l.b16 %v323
    %v632 = vunpack.c.l.b16 %v324
    %v633 = vunpack.c.h.b16 %v324
    %v634 = vunpack.c.l.b16 %v325
    %v635 = vunpack.c.l.b16 %v326
    %v636 = vunpack.c.h.b16 %v326
    %v637 = vunpack.c.l.b16 %v327
    %v638 = vunpack.c.l.b16 %v328
    %v639 = vunpack.c.h.b16 %v328
    %v640 = vunpack.c.l.b16 %v329
    %v641 = vunpack.c.l.b16 %v330
    %v642 = vunpack.c.h.b16 %v330
    %v643 = vunpack.c.l.b16 %v331
    %v644 = vunpack.c.l.b16 %v332
    %v645 = vunpack.c.h.b16 %v332
    %v646 = vunpack.c.l.b16 %v333
    %v647 = vunpack.c.l.b16 %v334
    %v648 = vunpack.c.h.b16 %v334
    %v649 = vunpack.c.l.b16 %v335
    %v650 = vunpack.c.l.b16 %v336
    %v651 = vunpack.c.h.b16 %v336
    %v652 = vunpack.c.l.b16 %v337
    %v653 = vunpack.c.l.b16 %v338
    %v654 = vunpack.c.h.b16 %v338
    %v655 = vunpack.c.l.b16 %v339
    %v656 = vunpack.c.l.b16 %v340
    %v657 = vunpack.c.h.b16 %v340
    %v658 = vunpack.c.l.b16 %v341
    %v659 = vunpack.c.l.b16 %v342
    %v660 = vunpack.c.h.b16 %v342
    %v661 = vunpack.c.l.b16 %v343
    %v662 = vunpack.c.l.b16 %v344
    %v663 = vunpack.c.h.b16 %v344
    %v664 = vunpack.c.l.b16 %v345
    %v665 = vunpack.c.l.b16 %v346
    %v666 = vunpack.c.h.b16 %v346
    %v667 = vunpack.c.l.b16 %v347
    %v668 = vunpack.c.l.b16 %v348
    %v669 = vunpack.c.h.b16 %v348
    %v670 = vunpack.c.l.b16 %v349
    %v671 = vunpack.c.l.b16 %v350
    %v672 = vunpack.c.h.b16 %v350
    %v673 = vunpack.c.l.b16 %v351
    %v674 = vunpack.c.l.b16 %v352
    %v675 = vunpack.c.h.b16 %v352
    %v676 = vunpack.c.l.b16 %v353
    %v677 = vunpack.c.l.b16 %v354
    %v678 = vunpack.c.h.b16 %v354
    %v679 = vunpack.c.l.b16 %v355
    %v680 = vunpack.c.l.b16 %v356
    %v681 = vunpack.c.h.b16 %v356
    %v682 = vunpack.c.l.b16 %v357
    %v683 = vunpack.c.l.b16 %v358
    %v684 = vunpack.c.h.b16 %v358
    %v685 = vunpack.c.l.b16 %v359
    %v686 = vunpack.c.l.b16 %v360
    %v687 = vunpack.c.h.b16 %v360
    %v688 = vunpack.c.l.b16 %v361
    %v689 = vunpack.c.l.b16 %v362
    %v690 = vunpack.c.h.b16 %v362
    %v691 = vunpack.c.l.b16 %v363
    %v692 = vunpack.c.l.b16 %v364
    %v693 = vunpack.c.h.b16 %v364
    %v694 = vunpack.c.l.b16 %v365
    %v695 = vunpack.c.l.b16 %v366
    %v696 = vunpack.c.h.b16 %v366
    %v697 = vunpack.c.l.b16 %v367
    %v698 = vunpack.c.l.b16 %v368
    %v699 = vunpack.c.h.b16 %v368
    %v700 = vunpack.c.l.b16 %v369
    %v701 = vunpack.c.l.b16 %v370
    %v702 = vunpack.c.h.b16 %v370
    %v703 = vunpack.c.l.b16 %v371
    %v704 = vunpack.c.l.b16 %v372
    %v705 = vunpack.c.h.b16 %v372
    %v706 = vunpack.c.l.b16 %v373
    %v707 = vunpack.c.l.b16 %v374
    %v708 = vunpack.c.h.b16 %v374
    %v709 = vunpack.c.l.b16 %v375
    %v710 = vunpack.c.l.b16 %v376
    %v711 = vunpack.c.h.b16 %v376
    %v712 = vunpack.c.l.b16 %v377
    %v713 = vunpack.c.l.b16 %v378
    %v714 = vunpack.c.h.b16 %v378
    %v715 = vunpack.c.l.b16 %v379
    %v716 = vunpack.c.l.b16 %v380
    %v717 = vunpack.c.h.b16 %v380
    %v718 = vunpack.c.l.b16 %v381
    %v719 = vpack.c.b16 %v530, %v527
    %v720 = vpack.c.b16 %v531, %v528
    %v721 = vpack.c.b16 %v532, %v529
    %v722 = vpack.c.b16 %v536, %v533
    %v723 = vpack.c.b16 %v537, %v534
    %v724 = vpack.c.b16 %v538, %v535
    %v725 = vpack.c.b16 %v542, %v539
    %v726 = vpack.c.b16 %v543, %v540
    %v727 = vpack.c.b16 %v544, %v541
    %v728 = vpack.c.b16 %v548, %v545
    %v729 = vpack.c.b16 %v549, %v546
    %v730 = vpack.c.b16 %v550, %v547
    %v731 = vpack.c.b16 %v554, %v551
    %v732 = vpack.c.b16 %v555, %v552
    %v733 = vpack.c.b16 %v556, %v553
    %v734 = vpack.c.b16 %v560, %v557
    %v735 = vpack.c.b16 %v561, %v558
    %v736 = vpack.c.b16 %v562, %v559
    %v737 = vpack.c.b16 %v566, %v563
    %v738 = vpack.c.b16 %v567, %v564
    %v739 = vpack.c.b16 %v568, %v565
    %v740 = vpack.c.b16 %v572, %v569
    %v741 = vpack.c.b16 %v573, %v570
    %v742 = vpack.c.b16 %v574, %v571
    %v743 = vpack.c.b16 %v578, %v575
    %v744 = vpack.c.b16 %v579, %v576
    %v745 = vpack.c.b16 %v580, %v577
    %v746 = vpack.c.b16 %v584, %v581
    %v747 = vpack.c.b16 %v585, %v582
    %v748 = vpack.c.b16 %v586, %v583
    %v749 = vpack.c.b16 %v590, %v587
    %v750 = vpack.c.b16 %v591, %v588
    %v751 = vpack.c.b16 %v592, %v589
    %v752 = vpack.c.b16 %v596, %v593
    %v753 = vpack.c.b16 %v597, %v594
    %v754 = vpack.c.b16 %v598, %v595
    %v755 = vpack.c.b16 %v602, %v599
    %v756 = vpack.c.b16 %v603, %v600
    %v757 = vpack.c.b16 %v604, %v601
    %v758 = vpack.c.b16 %v608, %v605
    %v759 = vpack.c.b16 %v609, %v606
    %v760 = vpack.c.b16 %v610, %v607
    %v761 = vpack.c.b16 %v614, %v611
    %v762 = vpack.c.b16 %v615, %v612
    %v763 = vpack.c.b16 %v616, %v613
    %v764 = vpack.c.b16 %v620, %v617
    %v765 = vpack.c.b16 %v621, %v618
    %v766 = vpack.c.b16 %v622, %v619
    %v767 = vpack.c.b16 %v626, %v623
    %v768 = vpack.c.b16 %v627, %v624
    %v769 = vpack.c.b16 %v628, %v625
    %v770 = vpack.c.b16 %v632, %v629
    %v771 = vpack.c.b16 %v633, %v630
    %v772 = vpack.c.b16 %v634, %v631
    %v773 = vpack.c.b16 %v638, %v635
    %v774 = vpack.c.b16 %v639, %v636
    %v775 = vpack.c.b16 %v640, %v637
    %v776 = vpack.c.b16 %v644, %v641
    %v777 = vpack.c.b16 %v645, %v642
    %v778 = vpack.c.b16 %v646, %v643
    %v779 = vpack.c.b16 %v650, %v647
    %v780 = vpack.c.b16 %v651, %v648
    %v781 = vpack.c.b16 %v652, %v649
    %v782 = vpack.c.b16 %v656, %v653
    %v783 = vpack.c.b16 %v657, %v654
    %v784 = vpack.c.b16 %v658, %v655
    %v785 = vpack.c.b16 %v662, %v659
    %v786 = vpack.c.b16 %v663, %v660
    %v787 = vpack.c.b16 %v664, %v661
    %v788 = vpack.c.b16 %v668, %v665
    %v789 = vpack.c.b16 %v669, %v666
    %v790 = vpack.c.b16 %v670, %v667
    %v791 = vpack.c.b16 %v674, %v671
    %v792 = vpack.c.b16 %v675, %v672
    %v793 = vpack.c.b16 %v676, %v673
    %v794 = vpack.c.b16 %v680, %v677
    %v795 = vpack.c.b16 %v681, %v678
    %v796 = vpack.c.b16 %v682, %v679
    %v797 = vpack.c.b16 %v686, %v683
    %v798 = vpack.c.b16 %v687, %v684
    %v799 = vpack.c.b16 %v688, %v685
    %v800 = vpack.c.b16 %v692, %v689
    %v801 = vpack.c.b16 %v693, %v690
    %v802 = vpack.c.b16 %v694, %v691
    %v803 = vpack.c.b16 %v698, %v695
    %v804 = vpack.c.b16 %v699, %v696
    %v805 = vpack.c.b16 %v700, %v697
    %v806 = vpack.c.b16 %v704, %v701
    %v807 = vpack.c.b16 %v705, %v702
    %v808 = vpack.c.b16 %v706, %v703
    %v809 = vpack.c.b16 %v710, %v707
    %v810 = vpack.c.b16 %v711, %v708
    %v811 = vpack.c.b16 %v712, %v709
    %v812 = vpack.c.b16 %v716, %v713
    %v813 = vpack.c.b16 %v717, %v714
    %v814 = vpack.c.b16 %v718, %v715
    %911 = vmatprep.subr.bf16.mxu0 %v720
    %912 = vmatpush1.bf16.msra.mxu0 %v719
    %913 = vmatprep.subr.bf16.mxu0 %v723
    %914 = vmatpush1.bf16.msra.mxu0 %v722
    %915 = vmatprep.subr.bf16.mxu0 %v726
    %916 = vmatpush1.bf16.msra.mxu0 %v725
    %917 = vmatprep.subr.bf16.mxu0 %v729
    %918 = vmatpush1.bf16.msra.mxu0 %v728
    %919 = vmatprep.subr.bf16.mxu0 %v732
    %920 = vmatpush1.bf16.msra.mxu0 %v731
    %921 = vmatprep.subr.bf16.mxu0 %v735
    %922 = vmatpush1.bf16.msra.mxu0 %v734
    %923 = vmatprep.subr.bf16.mxu0 %v738
    %924 = vmatpush1.bf16.msra.mxu0 %v737
    %925 = vmatprep.subr.bf16.mxu0 %v741
    %926 = vmatpush1.bf16.msra.mxu0 %v740
    %927 = vmatprep.subr.bf16.mxu0 %v744
    %928 = vmatpush1.bf16.msra.mxu0 %v743
    %929 = vmatprep.subr.bf16.mxu0 %v747
    %930 = vmatpush1.bf16.msra.mxu0 %v746
    %931 = vmatprep.subr.bf16.mxu0 %v750
    %932 = vmatpush1.bf16.msra.mxu0 %v749
    %933 = vmatprep.subr.bf16.mxu0 %v753
    %934 = vmatpush1.bf16.msra.mxu0 %v752
    %935 = vmatprep.subr.bf16.mxu0 %v756
    %936 = vmatpush1.bf16.msra.mxu0 %v755
    %937 = vmatprep.subr.bf16.mxu0 %v759
    %938 = vmatpush1.bf16.msra.mxu0 %v758
    %939 = vmatprep.subr.bf16.mxu0 %v762
    %940 = vmatpush1.bf16.msra.mxu0 %v761
    %941 = vmatprep.subr.bf16.mxu0 %v765
    %942 = vmatpush1.bf16.msra.mxu0 %v764
    %943 = vmatprep.mubr.bf16.mxu0 %v251
    %944 = vmatmul.mubr.bf16.gmra.mrb[0].mxu0 %v250
    %v945 = vpop.f32.mrb[0].mxu0
    %v946 = vadd.f32 %v387, %v945
    %v947 = vpop.f32.mrb[0].mxu0
    %v948 = vadd.f32 %v391, %v947
    %v949 = vpop.f32.mrb[0].mxu0
    %v950 = vpop.f32.mrb[0].mxu0
    %951 = vdwg.mxu0
    %952 = vmatprep.subr.bf16.mxu0 %v768
    %953 = vmatpush1.bf16.msra.mxu0 %v767
    %954 = vmatprep.subr.bf16.mxu0 %v771
    %955 = vmatpush1.bf16.msra.mxu0 %v770
    %956 = vmatprep.subr.bf16.mxu0 %v774
    %957 = vmatpush1.bf16.msra.mxu0 %v773
    %958 = vmatprep.subr.bf16.mxu0 %v777
    %959 = vmatpush1.bf16.msra.mxu0 %v776
    %960 = vmatprep.subr.bf16.mxu0 %v780
    %961 = vmatpush1.bf16.msra.mxu0 %v779
    %962 = vmatprep.subr.bf16.mxu0 %v783
    %963 = vmatpush1.bf16.msra.mxu0 %v782
    %964 = vmatprep.subr.bf16.mxu0 %v786
    %965 = vmatpush1.bf16.msra.mxu0 %v785
    %966 = vmatprep.subr.bf16.mxu0 %v789
    %967 = vmatpush1.bf16.msra.mxu0 %v788
    %968 = vmatprep.subr.bf16.mxu0 %v792
    %969 = vmatpush1.bf16.msra.mxu0 %v791
    %970 = vmatprep.subr.bf16.mxu0 %v795
    %971 = vmatpush1.bf16.msra.mxu0 %v794
    %972 = vmatprep.subr.bf16.mxu0 %v798
    %973 = vmatpush1.bf16.msra.mxu0 %v797
    %974 = vmatprep.subr.bf16.mxu0 %v801
    %975 = vmatpush1.bf16.msra.mxu0 %v800
    %976 = vmatprep.subr.bf16.mxu0 %v804
    %977 = vmatpush1.bf16.msra.mxu0 %v803
    %978 = vmatprep.subr.bf16.mxu0 %v807
    %979 = vmatpush1.bf16.msra.mxu0 %v806
    %980 = vmatprep.subr.bf16.mxu0 %v810
    %981 = vmatpush1.bf16.msra.mxu0 %v809
    %982 = vmatprep.subr.bf16.mxu0 %v813
    %983 = vmatpush1.bf16.msra.mxu0 %v812
    %984 = vmatprep.mubr.bf16.mxu0 %v253
    %985 = vmatmul.mubr.bf16.gmra.mrb[0].mxu0 %v252
    %v986 = vpop.f32.mrb[0].mxu0
    %v987 = vadd.f32 %v946, %v986
    %v988 = vpop.f32.mrb[0].mxu0
    %v989 = vadd.f32 %v948, %v988
    %v990 = vpop.f32.mrb[0].mxu0
    %v991 = vpop.f32.mrb[0].mxu0
    %992 = vdwg.mxu0
    %993 = vmatprep.subr.bf16.mxu0 0
    %994 = vmatpush1.bf16.msra.mxu0 %v721
    %995 = vmatprep.subr.bf16.mxu0 0
    %996 = vmatpush1.bf16.msra.mxu0 %v724
    %997 = vmatprep.subr.bf16.mxu0 0
    %998 = vmatpush1.bf16.msra.mxu0 %v727
    %999 = vmatprep.subr.bf16.mxu0 0
    %1000 = vmatpush1.bf16.msra.mxu0 %v730
    %1001 = vmatprep.subr.bf16.mxu0 0
    %1002 = vmatpush1.bf16.msra.mxu0 %v733
    %1003 = vmatprep.subr.bf16.mxu0 0
    %1004 = vmatpush1.bf16.msra.mxu0 %v736
    %1005 = vmatprep.subr.bf16.mxu0 0
    %1006 = vmatpush1.bf16.msra.mxu0 %v739
    %1007 = vmatprep.subr.bf16.mxu0 0
    %1008 = vmatpush1.bf16.msra.mxu0 %v742
    %1009 = vmatprep.subr.bf16.mxu0 0
    %1010 = vmatpush1.bf16.msra.mxu0 %v745
    %1011 = vmatprep.subr.bf16.mxu0 0
    %1012 = vmatpush1.bf16.msra.mxu0 %v748
    %1013 = vmatprep.subr.bf16.mxu0 0
    %1014 = vmatpush1.bf16.msra.mxu0 %v751
    %1015 = vmatprep.subr.bf16.mxu0 0
    %1016 = vmatpush1.bf16.msra.mxu0 %v754
    %1017 = vmatprep.subr.bf16.mxu0 0
    %1018 = vmatpush1.bf16.msra.mxu0 %v757
    %1019 = vmatprep.subr.bf16.mxu0 0
    %1020 = vmatpush1.bf16.msra.mxu0 %v760
    %1021 = vmatprep.subr.bf16.mxu0 0
    %1022 = vmatpush1.bf16.msra.mxu0 %v763
    %1023 = vmatprep.subr.bf16.mxu0 0
    %1024 = vmatpush1.bf16.msra.mxu0 %v766
    %1025 = vmatprep.mubr.bf16.mxu0 %v251
    %1026 = vmatmul.mubr.bf16.gmra.mrb[0].mxu0 %v250
    %v1027 = vpop.f32.mrb[0].mxu0
    %v1028 = vadd.f32 %v395, %v1027
    %v1029 = vpop.f32.mrb[0].mxu0
    %v1030 = vpop.f32.mrb[0].mxu0
    %v1031 = vpop.f32.mrb[0].mxu0
    %1032 = vdwg.mxu0
    %1033 = vmatprep.subr.bf16.mxu0 0
    %1034 = vmatpush1.bf16.msra.mxu0 %v769
    %1035 = vmatprep.subr.bf16.mxu0 0
    %1036 = vmatpush1.bf16.msra.mxu0 %v772
    %1037 = vmatprep.subr.bf16.mxu0 0
    %1038 = vmatpush1.bf16.msra.mxu0 %v775
    %1039 = vmatprep.subr.bf16.mxu0 0
    %1040 = vmatpush1.bf16.msra.mxu0 %v778
    %1041 = vmatprep.subr.bf16.mxu0 0
    %1042 = vmatpush1.bf16.msra.mxu0 %v781
    %1043 = vmatprep.subr.bf16.mxu0 0
    %1044 = vmatpush1.bf16.msra.mxu0 %v784
    %1045 = vmatprep.subr.bf16.mxu0 0
    %1046 = vmatpush1.bf16.msra.mxu0 %v787
    %1047 = vmatprep.subr.bf16.mxu0 0
    %1048 = vmatpush1.bf16.msra.mxu0 %v790
    %1049 = vmatprep.subr.bf16.mxu0 0
    %1050 = vmatpush1.bf16.msra.mxu0 %v793
    %1051 = vmatprep.subr.bf16.mxu0 0
    %1052 = vmatpush1.bf16.msra.mxu0 %v796
    %1053 = vmatprep.subr.bf16.mxu0 0
    %1054 = vmatpush1.bf16.msra.mxu0 %v799
    %1055 = vmatprep.subr.bf16.mxu0 0
    %1056 = vmatpush1.bf16.msra.mxu0 %v802
    %1057 = vmatprep.subr.bf16.mxu0 0
    %1058 = vmatpush1.bf16.msra.mxu0 %v805
    %1059 = vmatprep.subr.bf16.mxu0 0
    %1060 = vmatpush1.bf16.msra.mxu0 %v808
    %1061 = vmatprep.subr.bf16.mxu0 0
    %1062 = vmatpush1.bf16.msra.mxu0 %v811
    %1063 = vmatprep.subr.bf16.mxu0 0
    %1064 = vmatpush1.bf16.msra.mxu0 %v814
    %1065 = vmatprep.mubr.bf16.mxu0 %v253
    %1066 = vmatmul.mubr.bf16.gmra.mrb[0].mxu0 %v252
    %v1067 = vpop.f32.mrb[0].mxu0
    %v1068 = vadd.f32 %v1028, %v1067
    %v1069 = vpop.f32.mrb[0].mxu0
    %v1070 = vpop.f32.mrb[0].mxu0
    %v1071 = vpop.f32.mrb[0].mxu0
    %1072 = vdwg.mxu0
    %vm1073 = vcmp.ge.f32.partialorder %v987, 0.0
    %vm1074 = vcmp.ge.f32.partialorder %v989, 0.0
    %vm1075 = vcmp.ge.f32.partialorder %v1068, 0.0
    %v1076 = vmul.f32 %v987, 0.01
    %v1077 = vmul.f32 %v989, 0.01
    %v1078 = vmul.f32 %v1068, 0.01
    %v1079 = vsel %vm1073, %v987, %v1076
    %v1080 = vsel %vm1074, %v989, %v1077
    %v1081 = vsel %vm1075, %v1068, %v1078
    %v1082 = vpack.c.bf16 %v1079, %v1079
    %v1083 = vpack.c.bf16 %v1080, %v1080
    %v1084 = vpack.c.bf16 %v1081, %v1081
    %v1085 = vld [vmem:[#allocation8] sm:$0xf]
    %v1086 = vld [vmem:[#allocation8 + $0x4] sm:$0xf]
    %v1087 = vld [vmem:[#allocation8 + $0x8] sm:$0xf]
    %v1088 = vld [vmem:[#allocation8 + $0xc] sm:$0xf]
    %v1089 = vld [vmem:[#allocation8 + $0x10] sm:$0xf]
    %v1090 = vld [vmem:[#allocation8 + $0x14] sm:$0xf]
    %v1091 = vld [vmem:[#allocation8 + $0x18] sm:$0xf]
    %v1092 = vld [vmem:[#allocation8 + $0x1c] sm:$0xf]
    %v1093 = vld [vmem:[#allocation8 + $0x20] sm:$0xf]
    %v1094 = vld [vmem:[#allocation8 + $0x24] sm:$0xf]
    %v1095 = vld [vmem:[#allocation8 + $0x28] sm:$0xf]
    %v1096 = vld [vmem:[#allocation8 + $0x2c] sm:$0xf]
    %v1097 = vld [vmem:[#allocation8 + $0x30] sm:$0xf]
    %v1098 = vld [vmem:[#allocation8 + $0x34] sm:$0xf]
    %v1099 = vld [vmem:[#allocation8 + $0x38] sm:$0xf]
    %v1100 = vld [vmem:[#allocation8 + $0x3c] sm:$0xf]
    %v1101 = vld [vmem:[#allocation8 + $0x40] sm:$0xf]
    %v1102 = vld [vmem:[#allocation8 + $0x44] sm:$0xf]
    %v1103 = vld [vmem:[#allocation8 + $0x48] sm:$0xf]
    %v1104 = vld [vmem:[#allocation8 + $0x4c] sm:$0xf]
    %v1105 = vld [vmem:[#allocation8 + $0x50] sm:$0xf]
    %v1106 = vld [vmem:[#allocation8 + $0x54] sm:$0xf]
    %v1107 = vld [vmem:[#allocation8 + $0x58] sm:$0xf]
    %v1108 = vld [vmem:[#allocation8 + $0x5c] sm:$0xf]
    %v1109 = vld [vmem:[#allocation8 + $0x60] sm:$0xf]
    %v1110 = vld [vmem:[#allocation8 + $0x64] sm:$0xf]
    %v1111 = vld [vmem:[#allocation8 + $0x68] sm:$0xf]
    %v1112 = vld [vmem:[#allocation8 + $0x6c] sm:$0xf]
    %v1113 = vld [vmem:[#allocation8 + $0x70] sm:$0xf]
    %v1114 = vld [vmem:[#allocation8 + $0x74] sm:$0xf]
    %v1115 = vld [vmem:[#allocation8 + $0x78] sm:$0xf]
    %v1116 = vld [vmem:[#allocation8 + $0x7c] sm:$0xf]
    %v1117 = vld [vmem:[#allocation8 + $0x80] sm:$0xf]
    %v1118 = vld [vmem:[#allocation8 + $0x84] sm:$0xf]
    %v1119 = vld [vmem:[#allocation8 + $0x88] sm:$0xf]
    %v1120 = vld [vmem:[#allocation8 + $0x8c] sm:$0xf]
    %v1121 = vld [vmem:[#allocation8 + $0x90] sm:$0xf]
    %v1122 = vld [vmem:[#allocation8 + $0x94] sm:$0xf]
    %v1123 = vld [vmem:[#allocation8 + $0x98] sm:$0xf]
    %v1124 = vld [vmem:[#allocation8 + $0x9c] sm:$0xf]
    %v1125 = vld [vmem:[#allocation8 + $0xa0] sm:$0xf]
    %v1126 = vld [vmem:[#allocation8 + $0xa4] sm:$0xf]
    %v1127 = vld [vmem:[#allocation8 + $0xa8] sm:$0xf]
    %v1128 = vld [vmem:[#allocation8 + $0xac] sm:$0xf]
    %v1129 = vld [vmem:[#allocation8 + $0xb0] sm:$0xf]
    %v1130 = vld [vmem:[#allocation8 + $0xb4] sm:$0xf]
    %v1131 = vld [vmem:[#allocation8 + $0xb8] sm:$0xf]
    %v1132 = vld [vmem:[#allocation8 + $0xbc] sm:$0xf]
    %v1133 = vld [vmem:[%s6] sm:$0x1]
    %v1135 = vlaneseq
    %v1136 = vshrl.u32 %v1135, 7
    %v1137 = vsub.s32 0, %v1136
    %v1138 = vrot.slane %v1133, %v1137
    %v1188 = vunpack.c.l.b16 %v1085
    %v1189 = vunpack.c.l.b16 %v1086
    %v1190 = vunpack.c.l.b16 %v1087
    %v1191 = vunpack.c.l.b16 %v1088
    %v1192 = vunpack.c.l.b16 %v1089
    %v1193 = vunpack.c.l.b16 %v1090
    %v1194 = vunpack.c.l.b16 %v1091
    %v1195 = vunpack.c.l.b16 %v1092
    %v1196 = vunpack.c.l.b16 %v1093
    %v1197 = vunpack.c.l.b16 %v1094
    %v1198 = vunpack.c.l.b16 %v1095
    %v1199 = vunpack.c.l.b16 %v1096
    %v1200 = vunpack.c.l.b16 %v1097
    %v1201 = vunpack.c.l.b16 %v1098
    %v1202 = vunpack.c.l.b16 %v1099
    %v1203 = vunpack.c.l.b16 %v1100
    %v1204 = vunpack.c.l.b16 %v1101
    %v1205 = vunpack.c.l.b16 %v1102
    %v1206 = vunpack.c.l.b16 %v1103
    %v1207 = vunpack.c.l.b16 %v1104
    %v1208 = vunpack.c.l.b16 %v1105
    %v1209 = vunpack.c.l.b16 %v1106
    %v1210 = vunpack.c.l.b16 %v1107
    %v1211 = vunpack.c.l.b16 %v1108
    %v1212 = vunpack.c.l.b16 %v1109
    %v1213 = vunpack.c.l.b16 %v1110
    %v1214 = vunpack.c.l.b16 %v1111
    %v1215 = vunpack.c.l.b16 %v1112
    %v1216 = vunpack.c.l.b16 %v1113
    %v1217 = vunpack.c.l.b16 %v1114
    %v1218 = vunpack.c.l.b16 %v1115
    %v1219 = vunpack.c.l.b16 %v1116
    %v1220 = vunpack.c.l.b16 %v1117
    %v1221 = vunpack.c.l.b16 %v1118
    %v1222 = vunpack.c.l.b16 %v1119
    %v1223 = vunpack.c.l.b16 %v1120
    %v1224 = vunpack.c.l.b16 %v1121
    %v1225 = vunpack.c.l.b16 %v1122
    %v1226 = vunpack.c.l.b16 %v1123
    %v1227 = vunpack.c.l.b16 %v1124
    %v1228 = vunpack.c.l.b16 %v1125
    %v1229 = vunpack.c.l.b16 %v1126
    %v1230 = vunpack.c.l.b16 %v1127
    %v1231 = vunpack.c.l.b16 %v1128
    %v1232 = vunpack.c.l.b16 %v1129
    %v1233 = vunpack.c.l.b16 %v1130
    %v1234 = vunpack.c.l.b16 %v1131
    %v1235 = vunpack.c.l.b16 %v1132
    %v1236 = vpack.c.b16 %v1189, %v1188
    %v1237 = vpack.c.b16 %v1191, %v1190
    %v1238 = vpack.c.b16 %v1193, %v1192
    %v1239 = vpack.c.b16 %v1195, %v1194
    %v1240 = vpack.c.b16 %v1197, %v1196
    %v1241 = vpack.c.b16 %v1199, %v1198
    %v1242 = vpack.c.b16 %v1201, %v1200
    %v1243 = vpack.c.b16 %v1203, %v1202
    %v1244 = vpack.c.b16 %v1205, %v1204
    %v1245 = vpack.c.b16 %v1207, %v1206
    %v1246 = vpack.c.b16 %v1209, %v1208
    %v1247 = vpack.c.b16 %v1211, %v1210
    %v1248 = vpack.c.b16 %v1213, %v1212
    %v1249 = vpack.c.b16 %v1215, %v1214
    %v1250 = vpack.c.b16 %v1217, %v1216
    %v1251 = vpack.c.b16 %v1219, %v1218
    %v1252 = vpack.c.b16 %v1221, %v1220
    %v1253 = vpack.c.b16 %v1223, %v1222
    %v1254 = vpack.c.b16 %v1225, %v1224
    %v1255 = vpack.c.b16 %v1227, %v1226
    %v1256 = vpack.c.b16 %v1229, %v1228
    %v1257 = vpack.c.b16 %v1231, %v1230
    %v1258 = vpack.c.b16 %v1233, %v1232
    %v1259 = vpack.c.b16 %v1235, %v1234
    %1284 = vmatprep.subr.bf16.mxu0 0
    %1285 = vmatpush1.bf16.msra.mxu0 %v1236
    %1286 = vmatprep.subr.bf16.mxu0 0
    %1287 = vmatpush1.bf16.msra.mxu0 %v1237
    %1288 = vmatprep.subr.bf16.mxu0 0
    %1289 = vmatpush1.bf16.msra.mxu0 %v1238
    %1290 = vmatprep.subr.bf16.mxu0 0
    %1291 = vmatpush1.bf16.msra.mxu0 %v1239
    %1292 = vmatprep.subr.bf16.mxu0 0
    %1293 = vmatpush1.bf16.msra.mxu0 %v1240
    %1294 = vmatprep.subr.bf16.mxu0 0
    %1295 = vmatpush1.bf16.msra.mxu0 %v1241
    %1296 = vmatprep.subr.bf16.mxu0 0
    %1297 = vmatpush1.bf16.msra.mxu0 %v1242
    %1298 = vmatprep.subr.bf16.mxu0 0
    %1299 = vmatpush1.bf16.msra.mxu0 %v1243
    %1300 = vmatprep.subr.bf16.mxu0 0
    %1301 = vmatpush1.bf16.msra.mxu0 %v1244
    %1302 = vmatprep.subr.bf16.mxu0 0
    %1303 = vmatpush1.bf16.msra.mxu0 %v1245
    %1304 = vmatprep.subr.bf16.mxu0 0
    %1305 = vmatpush1.bf16.msra.mxu0 %v1246
    %1306 = vmatprep.subr.bf16.mxu0 0
    %1307 = vmatpush1.bf16.msra.mxu0 %v1247
    %1308 = vmatprep.subr.bf16.mxu0 0
    %1309 = vmatpush1.bf16.msra.mxu0 %v1248
    %1310 = vmatprep.subr.bf16.mxu0 0
    %1311 = vmatpush1.bf16.msra.mxu0 %v1249
    %1312 = vmatprep.subr.bf16.mxu0 0
    %1313 = vmatpush1.bf16.msra.mxu0 %v1250
    %1314 = vmatprep.subr.bf16.mxu0 0
    %1315 = vmatpush1.bf16.msra.mxu0 %v1251
    %1316 = vmatprep.mubr.bf16.mxu0 %v1083
    %1317 = vmatmul.mubr.bf16.gmra.mrb[0].mxu0 %v1082
    %v1318 = vpop.f32.mrb[0].mxu0
    %v1319 = vadd.f32 %v1138, %v1318
    %v1320 = vpop.f32.mrb[0].mxu0
    %v1321 = vpop.f32.mrb[0].mxu0
    %v1322 = vpop.f32.mrb[0].mxu0
    %1323 = vdwg.mxu0
    %1324 = vmatprep.subr.bf16.mxu0 0
    %1325 = vmatpush1.bf16.msra.mxu0 %v1252
    %1326 = vmatprep.subr.bf16.mxu0 0
    %1327 = vmatpush1.bf16.msra.mxu0 %v1253
    %1328 = vmatprep.subr.bf16.mxu0 0
    %1329 = vmatpush1.bf16.msra.mxu0 %v1254
    %1330 = vmatprep.subr.bf16.mxu0 0
    %1331 = vmatpush1.bf16.msra.mxu0 %v1255
    %1332 = vmatprep.subr.bf16.mxu0 0
    %1333 = vmatpush1.bf16.msra.mxu0 %v1256
    %1334 = vmatprep.subr.bf16.mxu0 0
    %1335 = vmatpush1.bf16.msra.mxu0 %v1257
    %1336 = vmatprep.subr.bf16.mxu0 0
    %1337 = vmatpush1.bf16.msra.mxu0 %v1258
    %1338 = vmatprep.subr.bf16.mxu0 0
    %1339 = vmatpush1.bf16.msra.mxu0 %v1259
    %1340 = vmatprep.subr.bf16.mxu0 0
    %1341 = vmatpush1.bf16.msra.mxu0 0
    %1342 = vmatprep.subr.bf16.mxu0 0
    %1343 = vmatpush1.bf16.msra.mxu0 0
    %1344 = vmatprep.subr.bf16.mxu0 0
    %1345 = vmatpush1.bf16.msra.mxu0 0
    %1346 = vmatprep.subr.bf16.mxu0 0
    %1347 = vmatpush1.bf16.msra.mxu0 0
    %1348 = vmatprep.subr.bf16.mxu0 0
    %1349 = vmatpush1.bf16.msra.mxu0 0
    %1350 = vmatprep.subr.bf16.mxu0 0
    %1351 = vmatpush1.bf16.msra.mxu0 0
    %1352 = vmatprep.subr.bf16.mxu0 0
    %1353 = vmatpush1.bf16.msra.mxu0 0
    %1354 = vmatprep.subr.bf16.mxu0 0
    %1355 = vmatpush1.bf16.msra.mxu0 0
    %1356 = vmatprep.mubr.bf16.mxu0 0
    %1357 = vmatmul.mubr.bf16.gmra.mrb[0].mxu0 %v1084
    %v1358 = vpop.f32.mrb[0].mxu0
    %v1359 = vadd.f32 %v1319, %v1358
    %v1360 = vpop.f32.mrb[0].mxu0
    %v1361 = vpop.f32.mrb[0].mxu0
    %v1362 = vpop.f32.mrb[0].mxu0
    %1363 = vdwg.mxu0
    %v1364 = vtanh.pop %v1359
    %1365 = vst [vmem:[#allocation10] sm:$0xff] %v1364
    // Predicated region
    $region46: #{tpu_custom_call.1} parent=1 // pred_check
      _
    $region47: #{tpu_custom_call.1} parent=1 // pred_check_branch
      %1367 = sbr.rel (0) target = $region49
    $region48: #{tpu_custom_call.1} parent=1 // pred_region
      %s1369 = ssub.s32 128, 128
      %1370 = vsyncadd [#allocation4], %s1369
      %s1372 = sshll.u32 [#allocation10], 4
      %s1373 = int_to_ptr.vmem [resolvable:$true] %s1372
      %1375 = dma.vmem_to_hbm [thread:$0]  %s1373, 128, %s7, [#allocation4]
    $region49: #{tpu_custom_call.1} parent=1 // pred_fallthru
      _
    // Predicated region
    $region50: #{tpu_custom_call.1} parent=1 // pred_check
      _
    $region51: #{tpu_custom_call.1} parent=1 // pred_check_branch
      %1377 = sbr.rel (0) target = $region53
    $region52: #{tpu_custom_call.1} parent=1 // pred_region
      %1378 = dma.done [#allocation4], 128
    $region53: #{tpu_custom_call.1} parent=1 // pred_fallthru
      _
    %1379 = vsyncpa [#allocation3], 1
    %1380 = vsyncpa [#allocation6], 1
    %1381 = vsyncpa [#allocation9], 1
    %1382 = vsyncpa [#allocation4], 1

</llo_original>
